<compile_context>
chip_gen: v6e
topology: v6e:2x2x1
jax: 0.10.0
libtpu: 0.0.40
codegen_flags: <defaults>
</compile_context>

<pallas_src>
import functools

import jax
import jax.numpy as jnp
from jax.experimental import pallas as pl
from jax.experimental.pallas import tpu as pltpu

NUM_ITEMS = 3883
NUM_YEARS = 81
NUM_AGES = 7
NUM_OCCUPS = 21
NUM_USERS = 6040
NUM_ZIPS = 3439
EMB = 128

USER_REP_DIM = 5 * EMB          # 640  (K of the MXU matmul, 5*128 lane-aligned)
ITEM_REP_DIM = 2 * EMB          # 256
LIN_IN = USER_REP_DIM + 1       # 641  (PyTorch Linear in-features)
LIN_OUT = ITEM_REP_DIM          # 256

MIN_TB = 16                     # bf16 sublane packing
MAX_TB = 2048                   # double-buffered working set ~12 MB


def _round_up(x, m):
    return ((x + m - 1) // m) * m


def _choose_tb(B):
    """Batch tile: big enough to amortize per-step overhead, but keep >=2 grid
    steps (v7x has 2 TensorCores) whenever the batch allows it."""
    if B <= MIN_TB:
        return B                 # single (possibly partial) tile: full-dim exemption
    half = -(-B // 2)
    return min(MAX_TB, _round_up(half, MIN_TB))


def _vmem_limit_bytes(TB):
    """Right-sized scoped-VMEM request (actual double-buffered working set +
    headroom) — leaves room on v7x's 64 MiB physical VMEM."""
    lane = 128
    ctx = TB * USER_REP_DIM * 2          # bf16
    items = TB * ITEM_REP_DIM * 2        # bf16
    imp = TB * lane * 4                  # (TB,1) f32, lane-padded to 128
    out = TB * lane * 4                  # (TB,1) f32, lane-padded to 128
    w = USER_REP_DIM * LIN_OUT * 2       # bf16, resident
    small = 2 * 8 * LIN_OUT * 4          # wr + bias rows (sublane padded)
    total = 2 * (ctx + items + imp + out + w + small)   # double buffering
    return min(64 * 1024 * 1024, total + 4 * 1024 * 1024)


def _ranker_kernel(ctx_ref, imp_ref, w_ref, wr_ref, b_ref, items_ref, out_ref):
    # MXU: bf16 x bf16 -> f32 accumulate.  K = 640 (lane aligned, no padding).
    cu = jnp.dot(ctx_ref[...], w_ref[...], preferred_element_type=jnp.float32)
    # Rank-1 correction for the impression real feature + bias (f32 VPU).
    cu = cu + imp_ref[...] * wr_ref[...] + b_ref[...]            # [TB, 256] f32
    # logits = rowwise dot(items, cu) == bmm(items[:,None,:], cu[:,:,None]).squeeze()
    items = items_ref[...].astype(jnp.float32)                   # bf16 -> f32
    out_ref[...] = jnp.sum(items * cu, axis=-1, keepdims=True)   # [TB, 1]


def ranker_pallas(ctx_bf16, imp, w_bf16, w_real, bias, items_bf16):
    """ctx_bf16: [B,640] bf16, imp: [B,1] f32, w_bf16: [640,256] bf16,
    w_real: [1,256] f32, bias: [1,256] f32, items_bf16: [B,256] bf16 -> [B] f32."""
    B = ctx_bf16.shape[0]
    TB = _choose_tb(B)
    grid = (pl.cdiv(B, TB),)      # ragged last block handled by Pallas masking

    cost = pl.CostEstimate(
        flops=2 * B * USER_REP_DIM * LIN_OUT + 4 * B * LIN_OUT,
        transcendentals=0,
        bytes_accessed=(B * USER_REP_DIM * 2 + B * ITEM_REP_DIM * 2 + B * 4
                        + USER_REP_DIM * LIN_OUT * 2 + 2 * LIN_OUT * 4 + B * 4),
    )

    out = pl.pallas_call(
        _ranker_kernel,
        out_shape=jax.ShapeDtypeStruct((B, 1), jnp.float32),
        grid=grid,
        in_specs=[
            pl.BlockSpec((TB, USER_REP_DIM), lambda i: (i, 0)),      # ctx (bf16)
            pl.BlockSpec((TB, 1), lambda i: (i, 0)),                 # impression real (f32)
            pl.BlockSpec((USER_REP_DIM, LIN_OUT), lambda i: (0, 0)), # W (VMEM resident)
            pl.BlockSpec((1, LIN_OUT), lambda i: (0, 0)),            # W row for real feat
            pl.BlockSpec((1, LIN_OUT), lambda i: (0, 0)),            # bias
            pl.BlockSpec((TB, ITEM_REP_DIM), lambda i: (i, 0)),      # items (bf16)
        ],
        out_specs=pl.BlockSpec((TB, 1), lambda i: (i, 0)),
        compiler_params=pltpu.CompilerParams(
            dimension_semantics=("parallel",),
            vmem_limit_bytes=_vmem_limit_bytes(TB),
        ),
        cost_estimate=cost,
    )(ctx_bf16, imp, w_bf16, w_real, bias, items_bf16)
    # Matches torch .squeeze() for B > 1 (B == 1 would be a 0-d scalar in torch).
    return out[:, 0]


def init_params(key):
    ks = jax.random.split(key, 9)
    p = {
        "item_emb":   jax.random.normal(ks[0], (NUM_ITEMS + 1, EMB), jnp.float32) * 0.02,
        "year_emb":   jax.random.normal(ks[1], (NUM_YEARS, EMB), jnp.float32) * 0.02,
        "user_emb":   jax.random.normal(ks[2], (NUM_USERS + 1, EMB), jnp.float32) * 0.02,
        "gender_emb": jax.random.normal(ks[3], (2, EMB), jnp.float32) * 0.02,
        "age_emb":    jax.random.normal(ks[4], (NUM_AGES, EMB), jnp.float32) * 0.02,
        "occup_emb":  jax.random.normal(ks[5], (NUM_OCCUPS, EMB), jnp.float32) * 0.02,
        "zip_emb":    jax.random.normal(ks[6], (NUM_ZIPS, EMB), jnp.float32) * 0.02,
        # nn.Linear(641, 256): weight [out, in], bias [out]  (PyTorch layout)
        "lin_w": jax.random.uniform(ks[7], (LIN_OUT, LIN_IN), jnp.float32,
                                    minval=-1.0, maxval=1.0) / jnp.sqrt(LIN_IN),
        "lin_b": jax.random.uniform(ks[8], (LIN_OUT,), jnp.float32,
                                    minval=-1.0, maxval=1.0) / jnp.sqrt(LIN_IN),
    }
    return p


_EMB_TABLES = ("item_emb", "year_emb", "user_emb", "gender_emb",
               "age_emb", "occup_emb", "zip_emb")


def prepare_params(params):
    """One-time param prep (nothing per-call):
      * embedding tables pre-cast to bf16 so the gathers read/emit bf16 and
        only a single bf16 [B,640]/[B,256] ever hits HBM,
      * impression column split out of the weight, 640-wide part pre-transposed
        and cast to bf16 for the MXU."""
    prepped = dict(params)
    for name in _EMB_TABLES:
        prepped[name + "_bf16"] = params[name].astype(jnp.bfloat16)
    lin_w = params["lin_w"]                                        # [256, 641]
    prepped["lin_w640_t_bf16"] = lin_w[:, :USER_REP_DIM].T.astype(jnp.bfloat16)  # [640,256]
    prepped["lin_w_real"] = lin_w[:, USER_REP_DIM][None, :]        # [1, 256] f32
    prepped["lin_b_row"] = params["lin_b"][None, :]                # [1, 256] f32
    return prepped


@functools.partial(jax.jit, static_argnums=())
def ranker_forward(params, user_cat, item_cat, impression_real):
    # --- UserRep (bf16 embedding gathers + concat: plain-JAX glue) ---
    # NOTE: a 0 id would wrap to the last row via index -1 (unlike PyTorch);
    # ids are expected to be in [1, NUM_*] as in the original dataset.
    ctx_bf16 = jnp.concatenate(
        [
            params["user_emb_bf16"][user_cat[:, 0] - 1],
            params["gender_emb_bf16"][user_cat[:, 1]],
            params["age_emb_bf16"][user_cat[:, 2]],
            params["occup_emb_bf16"][user_cat[:, 3]],
            params["zip_emb_bf16"][user_cat[:, 4]],
        ],
        axis=1,
    )  # [B, 640] bf16 — the only HBM materialization of the user context
    # --- ItemRep ---
    items_bf16 = jnp.concatenate(
        [
            params["item_emb_bf16"][item_cat[:, 0] - 1],
            params["year_emb_bf16"][item_cat[:, 1]],
        ],
        axis=1,
    )  # [B, 256] bf16
    # --- Linear + bmm fused in Pallas (MXU in bf16, f32 accumulate/epilogue) ---
    # TODO(synk): optionally fuse the embedding gathers into the kernel
    # (PrefetchScalarGridSpec + manual make_async_copy row gathers) to avoid
    # materializing ctx/items in HBM at all; benchmark per-row DMA overhead first.
    logits = ranker_pallas(
        ctx_bf16,
        impression_real,
        params["lin_w640_t_bf16"],
        params["lin_w_real"],
        params["lin_b_row"],
        items_bf16,
    )
    return logits  # [B]


if __name__ == "__main__":
    key = jax.random.PRNGKey(0)
    pkey, k1, k2, k3, k4, k5, k6, k7, k8 = jax.random.split(key, 9)

    params = prepare_params(init_params(pkey))

    B = 8
    # user categorical feats: [user_id(1..NUM_USERS), gender, age, occup, zip]
    user_cat = jnp.stack(
        [
            jax.random.randint(k1, (B,), 1, NUM_USERS + 1),
            jax.random.randint(k2, (B,), 0, 2),
            jax.random.randint(k3, (B,), 0, NUM_AGES),
            jax.random.randint(k4, (B,), 0, NUM_OCCUPS),
            jax.random.randint(k5, (B,), 0, NUM_ZIPS),
        ],
        axis=1,
    ).astype(jnp.int32)
    # item categorical feats: [item_id(1..NUM_ITEMS), year]
    item_cat = jnp.stack(
        [
            jax.random.randint(k6, (B,), 1, NUM_ITEMS + 1),
            jax.random.randint(k7, (B,), 0, NUM_YEARS),
        ],
        axis=1,
    ).astype(jnp.int32)
    impression_real = jax.random.normal(k8, (B, 1), jnp.float32)

    logits = ranker_forward(params, user_cat, item_cat, impression_real)
    jax.block_until_ready(logits)

    # reference check in plain JAX (full f32, PyTorch-identical math)
    users_ref = jnp.concatenate(
        [
            params["user_emb"][user_cat[:, 0] - 1],
            params["gender_emb"][user_cat[:, 1]],
            params["age_emb"][user_cat[:, 2]],
            params["occup_emb"][user_cat[:, 3]],
            params["zip_emb"][user_cat[:, 4]],
        ],
        axis=1,
    )
    items_ref = jnp.concatenate(
        [params["item_emb"][item_cat[:, 0] - 1], params["year_emb"][item_cat[:, 1]]],
        axis=1,
    )
    ctx_ref = jnp.concatenate([users_ref, impression_real], axis=1)
    cu_ref = ctx_ref @ params["lin_w"].T + params["lin_b"]
    logits_ref = jnp.sum(items_ref * cu_ref, axis=-1)

    assert logits.shape == (B,)
    # bf16 MXU inputs + bf16 items with f32 accumulation: loosened tolerance
    # vs the full-f32 reference.
    assert jnp.allclose(logits, logits_ref, atol=2e-3, rtol=2e-2), (
        jnp.max(jnp.abs(logits - logits_ref)))

    print("KERNEL_OK")
</pallas_src>

<mosaic_0001>
module attributes {stable_mosaic.version = 11 : i64} {
  func.func @_ranker_kernel(%arg0: i32, %arg1: memref<8x640xbf16, #tpu.memory_space<vmem>>, %arg2: memref<8x1xf32, #tpu.memory_space<vmem>>, %arg3: memref<640x256xbf16, #tpu.memory_space<vmem>>, %arg4: memref<1x256xf32, #tpu.memory_space<vmem>>, %arg5: memref<1x256xf32, #tpu.memory_space<vmem>>, %arg6: memref<8x256xbf16, #tpu.memory_space<vmem>>, %arg7: memref<8x1xf32, #tpu.memory_space<vmem>>) attributes {dimension_semantics = [#tpu.dimension_semantics<parallel>], iteration_bounds = array<i64: 1>, scalar_prefetch = 0 : i64, scratch_operands = 0 : i64, tpu.core_type = #tpu.core_type<tc>, window_params = [{transform_indices = @transform_0, window_bounds = array<i64: 8, 640>}, {transform_indices = @transform_1, window_bounds = array<i64: 8, 1>}, {pipeline_mode = #tpu.pipeline_mode<synchronous>, transform_indices = @transform_2, window_bounds = array<i64: 640, 256>}, {pipeline_mode = #tpu.pipeline_mode<synchronous>, transform_indices = @transform_3, window_bounds = array<i64: 1, 256>}, {pipeline_mode = #tpu.pipeline_mode<synchronous>, transform_indices = @transform_4, window_bounds = array<i64: 1, 256>}, {transform_indices = @transform_5, window_bounds = array<i64: 8, 256>}, {transform_indices = @transform_6, window_bounds = array<i64: 8, 1>}]} {
    %c0 = arith.constant 0 : index
    %c0_0 = arith.constant 0 : index
    %0 = vector.load %arg1[%c0, %c0_0] : memref<8x640xbf16, #tpu.memory_space<vmem>>, vector<8x640xbf16>
    %c0_1 = arith.constant 0 : index
    %c0_2 = arith.constant 0 : index
    %1 = vector.load %arg3[%c0_1, %c0_2] : memref<640x256xbf16, #tpu.memory_space<vmem>>, vector<640x256xbf16>
    %cst = arith.constant dense<0.000000e+00> : vector<8x256xf32>
    %2 = tpu.matmul %0, %1, %cst {dimension_numbers = #tpu.dot_dimension_numbers<[1], [0], [0], [1], [0, 0, 1, 1], [], []>} : vector<8x640xbf16>, vector<640x256xbf16>, vector<8x256xf32> -> vector<8x256xf32>
    %c0_3 = arith.constant 0 : index
    %c0_4 = arith.constant 0 : index
    %3 = vector.load %arg2[%c0_3, %c0_4] : memref<8x1xf32, #tpu.memory_space<vmem>>, vector<8x1xf32>
    %c0_5 = arith.constant 0 : index
    %c0_6 = arith.constant 0 : index
    %4 = vector.load %arg4[%c0_5, %c0_6] : memref<1x256xf32, #tpu.memory_space<vmem>>, vector<1x256xf32>
    %5 = vector.broadcast %3 : vector<8x1xf32> to vector<8x256xf32>
    %6 = vector.broadcast %4 : vector<1x256xf32> to vector<8x256xf32>
    %7 = arith.mulf %5, %6 : vector<8x256xf32>
    %8 = arith.addf %2, %7 : vector<8x256xf32>
    %c0_7 = arith.constant 0 : index
    %c0_8 = arith.constant 0 : index
    %9 = vector.load %arg5[%c0_7, %c0_8] : memref<1x256xf32, #tpu.memory_space<vmem>>, vector<1x256xf32>
    %10 = vector.broadcast %9 : vector<1x256xf32> to vector<8x256xf32>
    %11 = arith.addf %8, %10 : vector<8x256xf32>
    %c0_9 = arith.constant 0 : index
    %c0_10 = arith.constant 0 : index
    %12 = vector.load %arg6[%c0_9, %c0_10] : memref<8x256xbf16, #tpu.memory_space<vmem>>, vector<8x256xbf16>
    %13 = arith.extf %12 : vector<8x256xbf16> to vector<8x256xf32>
    %14 = arith.mulf %13, %11 : vector<8x256xf32>
    %cst_11 = arith.constant dense<0.000000e+00> : vector<8xf32>
    %15 = vector.multi_reduction <add>, %14, %cst_11 [1] : vector<8x256xf32> to vector<8xf32>
    %16 = vector.shape_cast %15 : vector<8xf32> to vector<8x1xf32>
    %c0_12 = arith.constant 0 : index
    %c0_13 = arith.constant 0 : index
    %17 = vector.load %arg7[%c0_12, %c0_13] : memref<8x1xf32, #tpu.memory_space<vmem>>, vector<8x1xf32>
    tpu.vector_store %arg7[%c0_12, %c0_13], %16 {strides = array<i32>} : memref<8x1xf32, #tpu.memory_space<vmem>>, vector<8x1xf32>,
    return
  }
  func.func @transform_0(%arg0: i32) -> (i32, i32) {
    %c0_i32 = arith.constant 0 : i32
    %c0_i32_0 = arith.constant 0 : i32
    return %arg0, %c0_i32 : i32, i32
  }
  func.func @transform_1(%arg0: i32) -> (i32, i32) {
    %c0_i32 = arith.constant 0 : i32
    %c0_i32_0 = arith.constant 0 : i32
    return %arg0, %c0_i32 : i32, i32
  }
  func.func @transform_2(%arg0: i32) -> (i32, i32) {
    %c0_i32 = arith.constant 0 : i32
    %c0_i32_0 = arith.constant 0 : i32
    %c0_i32_1 = arith.constant 0 : i32
    return %c0_i32, %c0_i32_0 : i32, i32
  }
  func.func @transform_3(%arg0: i32) -> (i32, i32) {
    %c0_i32 = arith.constant 0 : i32
    %c0_i32_0 = arith.constant 0 : i32
    %c0_i32_1 = arith.constant 0 : i32
    return %c0_i32, %c0_i32_0 : i32, i32
  }
  func.func @transform_4(%arg0: i32) -> (i32, i32) {
    %c0_i32 = arith.constant 0 : i32
    %c0_i32_0 = arith.constant 0 : i32
    %c0_i32_1 = arith.constant 0 : i32
    return %c0_i32, %c0_i32_0 : i32, i32
  }
  func.func @transform_5(%arg0: i32) -> (i32, i32) {
    %c0_i32 = arith.constant 0 : i32
    %c0_i32_0 = arith.constant 0 : i32
    return %arg0, %c0_i32 : i32, i32
  }
  func.func @transform_6(%arg0: i32) -> (i32, i32) {
    %c0_i32 = arith.constant 0 : i32
    %c0_i32_0 = arith.constant 0 : i32
    return %arg0, %c0_i32 : i32, i32
  }
}

</mosaic_0001>

<llo_original>
// kernel: ranker_forward.1
$region0: #{ranker_forward.1}
  #allocation0 [shape = 'u32[]', space=smem, size = 0x4, offset = 0x4, fixed_abs, tag = 'smem constant byte address 0x4 - core index']
  #allocation1 [shape = 'u32[144,128]{1,0:T(1,128)}', space=vmem, size = 0x12000, scoped, tag = 'internal scratch']
  %s0 = inlined_call_operand.vmem [shape: bf16[8,640], index: 0, kind: input, shape index: {}]
  %s1 = inlined_call_operand.vmem [shape: f32[8,1], index: 1, kind: input, shape index: {}]
  %s2 = inlined_call_operand.hbm [shape: bf16[640,256], index: 2, kind: input, shape index: {}]
  %s3 = inlined_call_operand.hbm [shape: f32[1,256], index: 3, kind: input, shape index: {}]
  %s4 = inlined_call_operand.hbm [shape: f32[1,256], index: 4, kind: input, shape index: {}]
  %s5 = inlined_call_operand.vmem [shape: bf16[8,256], index: 5, kind: input, shape index: {}]
  %s6 = inlined_call_operand.vmem [shape: f32[8,1], index: 6, kind: output, shape index: {}]
  %s7 = sld [smem:[#allocation0]]
  $region46: #{ranker_forward.1} parent=0
    _
  %s9 = ssub.s32 1, %s7
  %s10 = scalar_select 0, %s9, %s7
  $region1: #{ranker_forward.1} parent=0
    #allocation2 [shape = 'u8[327680]{0}', space=vmem, size = 0x50000, scoped, tag = 'input window, operand 2, single buffered']
    #allocation3 [shape = 's32[1]{0}', space=sflag, size = 0x4, scoped, tag = 'scoped memory for ranker_forward.1']
    #allocation4 [shape = 'u8[1024]{0}', space=vmem, size = 0x400, scoped, tag = 'input window, operand 3, single buffered']
    #allocation5 [shape = 's32[1]{0}', space=sflag, size = 0x4, scoped, tag = 'scoped memory for ranker_forward.1']
    #allocation6 [shape = 'u8[1024]{0}', space=vmem, size = 0x400, scoped, tag = 'input window, operand 4, single buffered']
    %11 = vsyncpa [#allocation3], 0
    %12 = vsyncpa [#allocation5], 0
    // Predicated region
    $region2: #{ranker_forward.1} parent=1 // pred_check
      _
    $region3: #{ranker_forward.1} parent=1 // pred_check_branch
      %14 = sbr.rel (0) target = $region5
    $region4: #{ranker_forward.1} parent=1 // pred_region
      _
    $region5: #{ranker_forward.1} parent=1 // pred_fallthru
      _
    // Predicated region
    $region6: #{ranker_forward.1} parent=1 // pred_check
      _
    $region7: #{ranker_forward.1} parent=1 // pred_check_branch
      %16 = sbr.rel (0) target = $region9
    $region8: #{ranker_forward.1} parent=1 // pred_region
      _
    $region9: #{ranker_forward.1} parent=1 // pred_fallthru
      _
    // Predicated region
    $region10: #{ranker_forward.1} parent=1 // pred_check
      _
    $region11: #{ranker_forward.1} parent=1 // pred_check_branch
      %18 = sbr.rel (0) target = $region13
    $region12: #{ranker_forward.1} parent=1 // pred_region
      %s20 = ssub.s32 10240, 10240
      %21 = vsyncadd [#allocation3], %s20
      %s22 = sshll.u32 [#allocation2], 4
      %s23 = int_to_ptr.vmem [resolvable:$true] %s22
      %28 = dma.hbm_to_vmem [thread:$0]  %s2, 10240, %s23, [#allocation3], 128, 128, 8
    $region13: #{ranker_forward.1} parent=1 // pred_fallthru
      _
    // Predicated region
    $region14: #{ranker_forward.1} parent=1 // pred_check
      _
    $region15: #{ranker_forward.1} parent=1 // pred_check_branch
      %30 = sbr.rel (0) target = $region17
    $region16: #{ranker_forward.1} parent=1 // pred_region
      %s32 = ssub.s32 32, 32
      %33 = vsyncadd [#allocation5], %s32
      %s35 = sshll.u32 [#allocation4], 4
      %s36 = int_to_ptr.vmem [resolvable:$true] %s35
      %38 = dma.hbm_to_vmem [thread:$0]  %s3, 32, %s36, [#allocation5]
    $region17: #{ranker_forward.1} parent=1 // pred_fallthru
      _
    // Predicated region
    $region18: #{ranker_forward.1} parent=1 // pred_check
      _
    $region19: #{ranker_forward.1} parent=1 // pred_check_branch
      %40 = sbr.rel (0) target = $region21
    $region20: #{ranker_forward.1} parent=1 // pred_region
      %s42 = ssub.s32 32, 32
      %43 = vsyncadd [#allocation5], %s42
      %s45 = sshll.u32 [#allocation6], 4
      %s46 = int_to_ptr.vmem [resolvable:$true] %s45
      %48 = dma.hbm_to_vmem [thread:$0]  %s4, 32, %s46, [#allocation5]
    $region21: #{ranker_forward.1} parent=1 // pred_fallthru
      _
    // Predicated region
    $region22: #{ranker_forward.1} parent=1 // pred_check
      _
    $region23: #{ranker_forward.1} parent=1 // pred_check_branch
      %50 = sbr.rel (0) target = $region25
    $region24: #{ranker_forward.1} parent=1 // pred_region
      _
    $region25: #{ranker_forward.1} parent=1 // pred_fallthru
      _
    // Predicated region
    $region26: #{ranker_forward.1} parent=1 // pred_check
      _
    $region27: #{ranker_forward.1} parent=1 // pred_check_branch
      %52 = sbr.rel (0) target = $region29
    $region28: #{ranker_forward.1} parent=1 // pred_region
      %53 = dma.done [#allocation3], 10240
    $region29: #{ranker_forward.1} parent=1 // pred_fallthru
      _
    // Predicated region
    $region30: #{ranker_forward.1} parent=1 // pred_check
      _
    $region31: #{ranker_forward.1} parent=1 // pred_check_branch
      %55 = sbr.rel (0) target = $region33
    $region32: #{ranker_forward.1} parent=1 // pred_region
      %56 = dma.done [#allocation5], 32
    $region33: #{ranker_forward.1} parent=1 // pred_fallthru
      _
    // Predicated region
    $region34: #{ranker_forward.1} parent=1 // pred_check
      _
    $region35: #{ranker_forward.1} parent=1 // pred_check_branch
      %58 = sbr.rel (0) target = $region37
    $region36: #{ranker_forward.1} parent=1 // pred_region
      %59 = dma.done [#allocation5], 32
    $region37: #{ranker_forward.1} parent=1 // pred_fallthru
      _
    %v61 = vld [vmem:[%s0] sm:$0xff]
    %v62 = vld [vmem:[%s0 + $0x8] sm:$0xff]
    %v63 = vld [vmem:[%s0 + $0x10] sm:$0xf]
    %v64 = vld [vmem:[#allocation2] sm:$0xff]
    %v65 = vld [vmem:[#allocation2 + $0x8] sm:$0xff]
    %v66 = vld [vmem:[#allocation2 + $0x10] sm:$0xff]
    %v67 = vld [vmem:[#allocation2 + $0x18] sm:$0xff]
    %v68 = vld [vmem:[#allocation2 + $0x20] sm:$0xff]
    %v69 = vld [vmem:[#allocation2 + $0x28] sm:$0xff]
    %v70 = vld [vmem:[#allocation2 + $0x30] sm:$0xff]
    %v71 = vld [vmem:[#allocation2 + $0x38] sm:$0xff]
    %v72 = vld [vmem:[#allocation2 + $0x40] sm:$0xff]
    %v73 = vld [vmem:[#allocation2 + $0x48] sm:$0xff]
    %v74 = vld [vmem:[#allocation2 + $0x50] sm:$0xff]
    %v75 = vld [vmem:[#allocation2 + $0x58] sm:$0xff]
    %v76 = vld [vmem:[#allocation2 + $0x60] sm:$0xff]
    %v77 = vld [vmem:[#allocation2 + $0x68] sm:$0xff]
    %v78 = vld [vmem:[#allocation2 + $0x70] sm:$0xff]
    %v79 = vld [vmem:[#allocation2 + $0x78] sm:$0xff]
    %v80 = vld [vmem:[#allocation2 + $0x80] sm:$0xff]
    %v81 = vld [vmem:[#allocation2 + $0x88] sm:$0xff]
    %v82 = vld [vmem:[#allocation2 + $0x90] sm:$0xff]
    %v83 = vld [vmem:[#allocation2 + $0x98] sm:$0xff]
    %v84 = vld [vmem:[#allocation2 + $0xa0] sm:$0xff]
    %v85 = vld [vmem:[#allocation2 + $0xa8] sm:$0xff]
    %v86 = vld [vmem:[#allocation2 + $0xb0] sm:$0xff]
    %v87 = vld [vmem:[#allocation2 + $0xb8] sm:$0xff]
    %v88 = vld [vmem:[#allocation2 + $0xc0] sm:$0xff]
    %v89 = vld [vmem:[#allocation2 + $0xc8] sm:$0xff]
    %v90 = vld [vmem:[#allocation2 + $0xd0] sm:$0xff]
    %v91 = vld [vmem:[#allocation2 + $0xd8] sm:$0xff]
    %v92 = vld [vmem:[#allocation2 + $0xe0] sm:$0xff]
    %v93 = vld [vmem:[#allocation2 + $0xe8] sm:$0xff]
    %v94 = vld [vmem:[#allocation2 + $0xf0] sm:$0xff]
    %v95 = vld [vmem:[#allocation2 + $0xf8] sm:$0xff]
    %v96 = vld [vmem:[#allocation2 + $0x100] sm:$0xff]
    %v97 = vld [vmem:[#allocation2 + $0x108] sm:$0xff]
    %v98 = vld [vmem:[#allocation2 + $0x110] sm:$0xff]
    %v99 = vld [vmem:[#allocation2 + $0x118] sm:$0xff]
    %v100 = vld [vmem:[#allocation2 + $0x120] sm:$0xff]
    %v101 = vld [vmem:[#allocation2 + $0x128] sm:$0xff]
    %v102 = vld [vmem:[#allocation2 + $0x130] sm:$0xff]
    %v103 = vld [vmem:[#allocation2 + $0x138] sm:$0xff]
    %v104 = vld [vmem:[#allocation2 + $0x140] sm:$0xff]
    %v105 = vld [vmem:[#allocation2 + $0x148] sm:$0xff]
    %v106 = vld [vmem:[#allocation2 + $0x150] sm:$0xff]
    %v107 = vld [vmem:[#allocation2 + $0x158] sm:$0xff]
    %v108 = vld [vmem:[#allocation2 + $0x160] sm:$0xff]
    %v109 = vld [vmem:[#allocation2 + $0x168] sm:$0xff]
    %v110 = vld [vmem:[#allocation2 + $0x170] sm:$0xff]
    %v111 = vld [vmem:[#allocation2 + $0x178] sm:$0xff]
    %v112 = vld [vmem:[#allocation2 + $0x180] sm:$0xff]
    %v113 = vld [vmem:[#allocation2 + $0x188] sm:$0xff]
    %v114 = vld [vmem:[#allocation2 + $0x190] sm:$0xff]
    %v115 = vld [vmem:[#allocation2 + $0x198] sm:$0xff]
    %v116 = vld [vmem:[#allocation2 + $0x1a0] sm:$0xff]
    %v117 = vld [vmem:[#allocation2 + $0x1a8] sm:$0xff]
    %v118 = vld [vmem:[#allocation2 + $0x1b0] sm:$0xff]
    %v119 = vld [vmem:[#allocation2 + $0x1b8] sm:$0xff]
    %v120 = vld [vmem:[#allocation2 + $0x1c0] sm:$0xff]
    %v121 = vld [vmem:[#allocation2 + $0x1c8] sm:$0xff]
    %v122 = vld [vmem:[#allocation2 + $0x1d0] sm:$0xff]
    %v123 = vld [vmem:[#allocation2 + $0x1d8] sm:$0xff]
    %v124 = vld [vmem:[#allocation2 + $0x1e0] sm:$0xff]
    %v125 = vld [vmem:[#allocation2 + $0x1e8] sm:$0xff]
    %v126 = vld [vmem:[#allocation2 + $0x1f0] sm:$0xff]
    %v127 = vld [vmem:[#allocation2 + $0x1f8] sm:$0xff]
    %v128 = vld [vmem:[#allocation2 + $0x200] sm:$0xff]
    %v129 = vld [vmem:[#allocation2 + $0x208] sm:$0xff]
    %v130 = vld [vmem:[#allocation2 + $0x210] sm:$0xff]
    %v131 = vld [vmem:[#allocation2 + $0x218] sm:$0xff]
    %v132 = vld [vmem:[#allocation2 + $0x220] sm:$0xff]
    %v133 = vld [vmem:[#allocation2 + $0x228] sm:$0xff]
    %v134 = vld [vmem:[#allocation2 + $0x230] sm:$0xff]
    %v135 = vld [vmem:[#allocation2 + $0x238] sm:$0xff]
    %v136 = vld [vmem:[#allocation2 + $0x240] sm:$0xff]
    %v137 = vld [vmem:[#allocation2 + $0x248] sm:$0xff]
    %v138 = vld [vmem:[#allocation2 + $0x250] sm:$0xff]
    %v139 = vld [vmem:[#allocation2 + $0x258] sm:$0xff]
    %v140 = vld [vmem:[#allocation2 + $0x260] sm:$0xff]
    %v141 = vld [vmem:[#allocation2 + $0x268] sm:$0xff]
    %v142 = vld [vmem:[#allocation2 + $0x270] sm:$0xff]
    %v143 = vld [vmem:[#allocation2 + $0x278] sm:$0xff]
    %v144 = vld [vmem:[%s1] sm:$0xff]
    %v145 = vld [vmem:[#allocation4] sm:$0x3]
    %147 = vset.pattern.permute.xlu0 0
    %148 = vperm.xlu0 %147, %v144
    %v149 = vpop.permute.xlu0 %148
    %v152 = vlaneseq
    %v153 = vshrl.u32 %v152, 7
    %v154 = vsub.s32 0, %v153
    %v155 = vrot.slane %v145, %v154
    %v156 = vlaneseq
    %v157 = vshrl.u32 %v156, 7
    %v158 = vsub.s32 1, %v157
    %v159 = vrot.slane %v145, %v158
    %v162 = vmul.f32 %v149, %v155
    %v163 = vmul.f32 %v149, %v159
    %v167 = vunpack.c.l.b16 %v61
    %v168 = vunpack.c.h.b16 %v61
    %v169 = vunpack.c.l.b16 %v62
    %v170 = vunpack.c.h.b16 %v62
    %v171 = vunpack.c.l.b16 %v63
    %v172 = vpack.c.b16 %v167, %v167
    %v173 = vpack.c.b16 %v168, %v168
    %v174 = vpack.c.b16 %v169, %v169
    %v175 = vpack.c.b16 %v170, %v170
    %v176 = vpack.c.b16 %v171, %v171
    %v262 = vunpack.c.l.b16 %v64
    %v263 = vunpack.c.h.b16 %v64
    %v264 = vunpack.c.l.b16 %v65
    %v265 = vunpack.c.h.b16 %v65
    %v266 = vunpack.c.l.b16 %v66
    %v267 = vunpack.c.h.b16 %v66
    %v268 = vunpack.c.l.b16 %v67
    %v269 = vunpack.c.h.b16 %v67
    %v270 = vunpack.c.l.b16 %v68
    %v271 = vunpack.c.h.b16 %v68
    %v272 = vunpack.c.l.b16 %v69
    %v273 = vunpack.c.h.b16 %v69
    %v274 = vunpack.c.l.b16 %v70
    %v275 = vunpack.c.h.b16 %v70
    %v276 = vunpack.c.l.b16 %v71
    %v277 = vunpack.c.h.b16 %v71
    %v278 = vunpack.c.l.b16 %v72
    %v279 = vunpack.c.h.b16 %v72
    %v280 = vunpack.c.l.b16 %v73
    %v281 = vunpack.c.h.b16 %v73
    %v282 = vunpack.c.l.b16 %v74
    %v283 = vunpack.c.h.b16 %v74
    %v284 = vunpack.c.l.b16 %v75
    %v285 = vunpack.c.h.b16 %v75
    %v286 = vunpack.c.l.b16 %v76
    %v287 = vunpack.c.h.b16 %v76
    %v288 = vunpack.c.l.b16 %v77
    %v289 = vunpack.c.h.b16 %v77
    %v290 = vunpack.c.l.b16 %v78
    %v291 = vunpack.c.h.b16 %v78
    %v292 = vunpack.c.l.b16 %v79
    %v293 = vunpack.c.h.b16 %v79
    %v294 = vunpack.c.l.b16 %v80
    %v295 = vunpack.c.h.b16 %v80
    %v296 = vunpack.c.l.b16 %v81
    %v297 = vunpack.c.h.b16 %v81
    %v298 = vunpack.c.l.b16 %v82
    %v299 = vunpack.c.h.b16 %v82
    %v300 = vunpack.c.l.b16 %v83
    %v301 = vunpack.c.h.b16 %v83
    %v302 = vunpack.c.l.b16 %v84
    %v303 = vunpack.c.h.b16 %v84
    %v304 = vunpack.c.l.b16 %v85
    %v305 = vunpack.c.h.b16 %v85
    %v306 = vunpack.c.l.b16 %v86
    %v307 = vunpack.c.h.b16 %v86
    %v308 = vunpack.c.l.b16 %v87
    %v309 = vunpack.c.h.b16 %v87
    %v310 = vunpack.c.l.b16 %v88
    %v311 = vunpack.c.h.b16 %v88
    %v312 = vunpack.c.l.b16 %v89
    %v313 = vunpack.c.h.b16 %v89
    %v314 = vunpack.c.l.b16 %v90
    %v315 = vunpack.c.h.b16 %v90
    %v316 = vunpack.c.l.b16 %v91
    %v317 = vunpack.c.h.b16 %v91
    %v318 = vunpack.c.l.b16 %v92
    %v319 = vunpack.c.h.b16 %v92
    %v320 = vunpack.c.l.b16 %v93
    %v321 = vunpack.c.h.b16 %v93
    %v322 = vunpack.c.l.b16 %v94
    %v323 = vunpack.c.h.b16 %v94
    %v324 = vunpack.c.l.b16 %v95
    %v325 = vunpack.c.h.b16 %v95
    %v326 = vunpack.c.l.b16 %v96
    %v327 = vunpack.c.h.b16 %v96
    %v328 = vunpack.c.l.b16 %v97
    %v329 = vunpack.c.h.b16 %v97
    %v330 = vunpack.c.l.b16 %v98
    %v331 = vunpack.c.h.b16 %v98
    %v332 = vunpack.c.l.b16 %v99
    %v333 = vunpack.c.h.b16 %v99
    %v334 = vunpack.c.l.b16 %v100
    %v335 = vunpack.c.h.b16 %v100
    %v336 = vunpack.c.l.b16 %v101
    %v337 = vunpack.c.h.b16 %v101
    %v338 = vunpack.c.l.b16 %v102
    %v339 = vunpack.c.h.b16 %v102
    %v340 = vunpack.c.l.b16 %v103
    %v341 = vunpack.c.h.b16 %v103
    %v342 = vunpack.c.l.b16 %v104
    %v343 = vunpack.c.h.b16 %v104
    %v344 = vunpack.c.l.b16 %v105
    %v345 = vunpack.c.h.b16 %v105
    %v346 = vunpack.c.l.b16 %v106
    %v347 = vunpack.c.h.b16 %v106
    %v348 = vunpack.c.l.b16 %v107
    %v349 = vunpack.c.h.b16 %v107
    %v350 = vunpack.c.l.b16 %v108
    %v351 = vunpack.c.h.b16 %v108
    %v352 = vunpack.c.l.b16 %v109
    %v353 = vunpack.c.h.b16 %v109
    %v354 = vunpack.c.l.b16 %v110
    %v355 = vunpack.c.h.b16 %v110
    %v356 = vunpack.c.l.b16 %v111
    %v357 = vunpack.c.h.b16 %v111
    %v358 = vunpack.c.l.b16 %v112
    %v359 = vunpack.c.h.b16 %v112
    %v360 = vunpack.c.l.b16 %v113
    %v361 = vunpack.c.h.b16 %v113
    %v362 = vunpack.c.l.b16 %v114
    %v363 = vunpack.c.h.b16 %v114
    %v364 = vunpack.c.l.b16 %v115
    %v365 = vunpack.c.h.b16 %v115
    %v366 = vunpack.c.l.b16 %v116
    %v367 = vunpack.c.h.b16 %v116
    %v368 = vunpack.c.l.b16 %v117
    %v369 = vunpack.c.h.b16 %v117
    %v370 = vunpack.c.l.b16 %v118
    %v371 = vunpack.c.h.b16 %v118
    %v372 = vunpack.c.l.b16 %v119
    %v373 = vunpack.c.h.b16 %v119
    %v374 = vunpack.c.l.b16 %v120
    %v375 = vunpack.c.h.b16 %v120
    %v376 = vunpack.c.l.b16 %v121
    %v377 = vunpack.c.h.b16 %v121
    %v378 = vunpack.c.l.b16 %v122
    %v379 = vunpack.c.h.b16 %v122
    %v380 = vunpack.c.l.b16 %v123
    %v381 = vunpack.c.h.b16 %v123
    %v382 = vunpack.c.l.b16 %v124
    %v383 = vunpack.c.h.b16 %v124
    %v384 = vunpack.c.l.b16 %v125
    %v385 = vunpack.c.h.b16 %v125
    %v386 = vunpack.c.l.b16 %v126
    %v387 = vunpack.c.h.b16 %v126
    %v388 = vunpack.c.l.b16 %v127
    %v389 = vunpack.c.h.b16 %v127
    %v390 = vunpack.c.l.b16 %v128
    %v391 = vunpack.c.h.b16 %v128
    %v392 = vunpack.c.l.b16 %v129
    %v393 = vunpack.c.h.b16 %v129
    %v394 = vunpack.c.l.b16 %v130
    %v395 = vunpack.c.h.b16 %v130
    %v396 = vunpack.c.l.b16 %v131
    %v397 = vunpack.c.h.b16 %v131
    %v398 = vunpack.c.l.b16 %v132
    %v399 = vunpack.c.h.b16 %v132
    %v400 = vunpack.c.l.b16 %v133
    %v401 = vunpack.c.h.b16 %v133
    %v402 = vunpack.c.l.b16 %v134
    %v403 = vunpack.c.h.b16 %v134
    %v404 = vunpack.c.l.b16 %v135
    %v405 = vunpack.c.h.b16 %v135
    %v406 = vunpack.c.l.b16 %v136
    %v407 = vunpack.c.h.b16 %v136
    %v408 = vunpack.c.l.b16 %v137
    %v409 = vunpack.c.h.b16 %v137
    %v410 = vunpack.c.l.b16 %v138
    %v411 = vunpack.c.h.b16 %v138
    %v412 = vunpack.c.l.b16 %v139
    %v413 = vunpack.c.h.b16 %v139
    %v414 = vunpack.c.l.b16 %v140
    %v415 = vunpack.c.h.b16 %v140
    %v416 = vunpack.c.l.b16 %v141
    %v417 = vunpack.c.h.b16 %v141
    %v418 = vunpack.c.l.b16 %v142
    %v419 = vunpack.c.h.b16 %v142
    %v420 = vunpack.c.l.b16 %v143
    %v421 = vunpack.c.h.b16 %v143
    %v422 = vpack.c.b16 %v264, %v262
    %v423 = vpack.c.b16 %v265, %v263
    %v424 = vpack.c.b16 %v268, %v266
    %v425 = vpack.c.b16 %v269, %v267
    %v426 = vpack.c.b16 %v272, %v270
    %v427 = vpack.c.b16 %v273, %v271
    %v428 = vpack.c.b16 %v276, %v274
    %v429 = vpack.c.b16 %v277, %v275
    %v430 = vpack.c.b16 %v280, %v278
    %v431 = vpack.c.b16 %v281, %v279
    %v432 = vpack.c.b16 %v284, %v282
    %v433 = vpack.c.b16 %v285, %v283
    %v434 = vpack.c.b16 %v288, %v286
    %v435 = vpack.c.b16 %v289, %v287
    %v436 = vpack.c.b16 %v292, %v290
    %v437 = vpack.c.b16 %v293, %v291
    %v438 = vpack.c.b16 %v296, %v294
    %v439 = vpack.c.b16 %v297, %v295
    %v440 = vpack.c.b16 %v300, %v298
    %v441 = vpack.c.b16 %v301, %v299
    %v442 = vpack.c.b16 %v304, %v302
    %v443 = vpack.c.b16 %v305, %v303
    %v444 = vpack.c.b16 %v308, %v306
    %v445 = vpack.c.b16 %v309, %v307
    %v446 = vpack.c.b16 %v312, %v310
    %v447 = vpack.c.b16 %v313, %v311
    %v448 = vpack.c.b16 %v316, %v314
    %v449 = vpack.c.b16 %v317, %v315
    %v450 = vpack.c.b16 %v320, %v318
    %v451 = vpack.c.b16 %v321, %v319
    %v452 = vpack.c.b16 %v324, %v322
    %v453 = vpack.c.b16 %v325, %v323
    %v454 = vpack.c.b16 %v328, %v326
    %v455 = vpack.c.b16 %v329, %v327
    %v456 = vpack.c.b16 %v332, %v330
    %v457 = vpack.c.b16 %v333, %v331
    %v458 = vpack.c.b16 %v336, %v334
    %v459 = vpack.c.b16 %v337, %v335
    %v460 = vpack.c.b16 %v340, %v338
    %v461 = vpack.c.b16 %v341, %v339
    %v462 = vpack.c.b16 %v344, %v342
    %v463 = vpack.c.b16 %v345, %v343
    %v464 = vpack.c.b16 %v348, %v346
    %v465 = vpack.c.b16 %v349, %v347
    %v466 = vpack.c.b16 %v352, %v350
    %v467 = vpack.c.b16 %v353, %v351
    %v468 = vpack.c.b16 %v356, %v354
    %v469 = vpack.c.b16 %v357, %v355
    %v470 = vpack.c.b16 %v360, %v358
    %v471 = vpack.c.b16 %v361, %v359
    %v472 = vpack.c.b16 %v364, %v362
    %v473 = vpack.c.b16 %v365, %v363
    %v474 = vpack.c.b16 %v368, %v366
    %v475 = vpack.c.b16 %v369, %v367
    %v476 = vpack.c.b16 %v372, %v370
    %v477 = vpack.c.b16 %v373, %v371
    %v478 = vpack.c.b16 %v376, %v374
    %v479 = vpack.c.b16 %v377, %v375
    %v480 = vpack.c.b16 %v380, %v378
    %v481 = vpack.c.b16 %v381, %v379
    %v482 = vpack.c.b16 %v384, %v382
    %v483 = vpack.c.b16 %v385, %v383
    %v484 = vpack.c.b16 %v388, %v386
    %v485 = vpack.c.b16 %v389, %v387
    %v486 = vpack.c.b16 %v392, %v390
    %v487 = vpack.c.b16 %v393, %v391
    %v488 = vpack.c.b16 %v396, %v394
    %v489 = vpack.c.b16 %v397, %v395
    %v490 = vpack.c.b16 %v400, %v398
    %v491 = vpack.c.b16 %v401, %v399
    %v492 = vpack.c.b16 %v404, %v402
    %v493 = vpack.c.b16 %v405, %v403
    %v494 = vpack.c.b16 %v408, %v406
    %v495 = vpack.c.b16 %v409, %v407
    %v496 = vpack.c.b16 %v412, %v410
    %v497 = vpack.c.b16 %v413, %v411
    %v498 = vpack.c.b16 %v416, %v414
    %v499 = vpack.c.b16 %v417, %v415
    %v500 = vpack.c.b16 %v420, %v418
    %v501 = vpack.c.b16 %v421, %v419
    %582 = vmatprep.subr.bf16.mxu0 %v437
    %583 = vmatpush1.bf16.msra.mxu0 %v436
    %584 = vmatprep.subr.bf16.mxu0 %v435
    %585 = vmatpush1.bf16.msra.mxu0 %v434
    %586 = vmatprep.subr.bf16.mxu0 %v433
    %587 = vmatpush1.bf16.msra.mxu0 %v432
    %588 = vmatprep.subr.bf16.mxu0 %v431
    %589 = vmatpush1.bf16.msra.mxu0 %v430
    %590 = vmatprep.subr.bf16.mxu0 %v429
    %591 = vmatpush1.bf16.msra.mxu0 %v428
    %592 = vmatprep.subr.bf16.mxu0 %v427
    %593 = vmatpush1.bf16.msra.mxu0 %v426
    %594 = vmatprep.subr.bf16.mxu0 %v425
    %595 = vmatpush1.bf16.msra.mxu0 %v424
    %596 = vmatprep.subr.bf16.mxu0 %v423
    %597 = vmatpush1.bf16.msra.mxu0 %v422
    %598 = vmatprep.subr.bf16.mxu0 %v453
    %599 = vmatpush2.bf16.msra.mxu0 %v452
    %600 = vmatprep.subr.bf16.mxu0 %v451
    %601 = vmatpush2.bf16.msra.mxu0 %v450
    %602 = vmatprep.subr.bf16.mxu0 %v449
    %603 = vmatpush2.bf16.msra.mxu0 %v448
    %604 = vmatprep.subr.bf16.mxu0 %v447
    %605 = vmatpush2.bf16.msra.mxu0 %v446
    %606 = vmatprep.subr.bf16.mxu0 %v445
    %607 = vmatpush2.bf16.msra.mxu0 %v444
    %608 = vmatprep.subr.bf16.mxu0 %v443
    %609 = vmatpush2.bf16.msra.mxu0 %v442
    %610 = vmatprep.subr.bf16.mxu0 %v441
    %611 = vmatpush2.bf16.msra.mxu0 %v440
    %612 = vmatprep.subr.bf16.mxu0 %v439
    %613 = vmatpush2.bf16.msra.mxu0 %v438
    %614 = vmatprep.mubr.bf16.mxu0 %v173
    %615 = vmatmul.mubr.bf16.gmra.mxu0 %v172
    %v616 = vpop.f32.mrf.mxu0
    %v617 = vadd.f32 %v162, %v616
    %v618 = vpop.f32.mrf.mxu0
    %v619 = vadd.f32 %v163, %v618
    %v620 = vpop.f32.mrf.mxu0
    %v621 = vpop.f32.mrf.mxu0
    %622 = vdwg.mxu0
    %623 = vmatprep.subr.bf16.mxu0 %v469
    %624 = vmatpush1.bf16.msra.mxu0 %v468
    %625 = vmatprep.subr.bf16.mxu0 %v467
    %626 = vmatpush1.bf16.msra.mxu0 %v466
    %627 = vmatprep.subr.bf16.mxu0 %v465
    %628 = vmatpush1.bf16.msra.mxu0 %v464
    %629 = vmatprep.subr.bf16.mxu0 %v463
    %630 = vmatpush1.bf16.msra.mxu0 %v462
    %631 = vmatprep.subr.bf16.mxu0 %v461
    %632 = vmatpush1.bf16.msra.mxu0 %v460
    %633 = vmatprep.subr.bf16.mxu0 %v459
    %634 = vmatpush1.bf16.msra.mxu0 %v458
    %635 = vmatprep.subr.bf16.mxu0 %v457
    %636 = vmatpush1.bf16.msra.mxu0 %v456
    %637 = vmatprep.subr.bf16.mxu0 %v455
    %638 = vmatpush1.bf16.msra.mxu0 %v454
    %639 = vmatprep.subr.bf16.mxu0 %v485
    %640 = vmatpush2.bf16.msra.mxu0 %v484
    %641 = vmatprep.subr.bf16.mxu0 %v483
    %642 = vmatpush2.bf16.msra.mxu0 %v482
    %643 = vmatprep.subr.bf16.mxu0 %v481
    %644 = vmatpush2.bf16.msra.mxu0 %v480
    %645 = vmatprep.subr.bf16.mxu0 %v479
    %646 = vmatpush2.bf16.msra.mxu0 %v478
    %647 = vmatprep.subr.bf16.mxu0 %v477
    %648 = vmatpush2.bf16.msra.mxu0 %v476
    %649 = vmatprep.subr.bf16.mxu0 %v475
    %650 = vmatpush2.bf16.msra.mxu0 %v474
    %651 = vmatprep.subr.bf16.mxu0 %v473
    %652 = vmatpush2.bf16.msra.mxu0 %v472
    %653 = vmatprep.subr.bf16.mxu0 %v471
    %654 = vmatpush2.bf16.msra.mxu0 %v470
    %655 = vmatprep.mubr.bf16.mxu0 %v175
    %656 = vmatmul.mubr.bf16.gmra.mxu0 %v174
    %v657 = vpop.f32.mrf.mxu0
    %v658 = vadd.f32 %v617, %v657
    %v659 = vpop.f32.mrf.mxu0
    %v660 = vadd.f32 %v619, %v659
    %v661 = vpop.f32.mrf.mxu0
    %v662 = vpop.f32.mrf.mxu0
    %663 = vdwg.mxu0
    %664 = vmatprep.subr.bf16.mxu0 %v501
    %665 = vmatpush1.bf16.msra.mxu0 %v500
    %666 = vmatprep.subr.bf16.mxu0 %v499
    %667 = vmatpush1.bf16.msra.mxu0 %v498
    %668 = vmatprep.subr.bf16.mxu0 %v497
    %669 = vmatpush1.bf16.msra.mxu0 %v496
    %670 = vmatprep.subr.bf16.mxu0 %v495
    %671 = vmatpush1.bf16.msra.mxu0 %v494
    %672 = vmatprep.subr.bf16.mxu0 %v493
    %673 = vmatpush1.bf16.msra.mxu0 %v492
    %674 = vmatprep.subr.bf16.mxu0 %v491
    %675 = vmatpush1.bf16.msra.mxu0 %v490
    %676 = vmatprep.subr.bf16.mxu0 %v489
    %677 = vmatpush1.bf16.msra.mxu0 %v488
    %678 = vmatprep.subr.bf16.mxu0 %v487
    %679 = vmatpush1.bf16.msra.mxu0 %v486
    %680 = vmatprep.subr.bf16.mxu0 0
    %681 = vmatpush2.bf16.msra.mxu0 0
    %682 = vmatprep.subr.bf16.mxu0 0
    %683 = vmatpush2.bf16.msra.mxu0 0
    %684 = vmatprep.subr.bf16.mxu0 0
    %685 = vmatpush2.bf16.msra.mxu0 0
    %686 = vmatprep.subr.bf16.mxu0 0
    %687 = vmatpush2.bf16.msra.mxu0 0
    %688 = vmatprep.subr.bf16.mxu0 0
    %689 = vmatpush2.bf16.msra.mxu0 0
    %690 = vmatprep.subr.bf16.mxu0 0
    %691 = vmatpush2.bf16.msra.mxu0 0
    %692 = vmatprep.subr.bf16.mxu0 0
    %693 = vmatpush2.bf16.msra.mxu0 0
    %694 = vmatprep.subr.bf16.mxu0 0
    %695 = vmatpush2.bf16.msra.mxu0 0
    %696 = vmatprep.mubr.bf16.mxu0 0
    %697 = vmatmul.mubr.bf16.gmra.mxu0 %v176
    %v698 = vpop.f32.mrf.mxu0
    %v699 = vadd.f32 %v658, %v698
    %v700 = vpop.f32.mrf.mxu0
    %v701 = vadd.f32 %v660, %v700
    %v702 = vpop.f32.mrf.mxu0
    %v703 = vpop.f32.mrf.mxu0
    %704 = vdwg.mxu0
    %v705 = vld [vmem:[#allocation6] sm:$0x3]
    %v707 = vlaneseq
    %v708 = vshrl.u32 %v707, 7
    %v709 = vsub.s32 0, %v708
    %v710 = vrot.slane %v705, %v709
    %v711 = vlaneseq
    %v712 = vshrl.u32 %v711, 7
    %v713 = vsub.s32 1, %v712
    %v714 = vrot.slane %v705, %v713
    %v717 = vadd.f32 %v699, %v710
    %v718 = vadd.f32 %v701, %v714
    %v719 = vld [vmem:[%s5] sm:$0xff]
    %v720 = vunpack.c.l.bf16 %v719
    %v721 = vunpack.c.h.bf16 %v719
    %v722 = vmul.f32 %v720, %v717
    %v723 = vmul.f32 %v721, %v718
    %v724 = vadd.f32 %v722, %v723
    %725 = vadd.xlane.f32.xlu0 %v724
    %v726 = vpop.xlane.xlu0 %725
    %vm727 = vcmask 7168
    %728 = vst.msk [vmem:[%s6] sm:$0xff] %vm727, %v726
    // Predicated region
    $region38: #{ranker_forward.1} parent=1 // pred_check
      _
    $region39: #{ranker_forward.1} parent=1 // pred_check_branch
      %730 = sbr.rel (0) target = $region41
    $region40: #{ranker_forward.1} parent=1 // pred_region
      _
    $region41: #{ranker_forward.1} parent=1 // pred_fallthru
      _
    // Predicated region
    $region42: #{ranker_forward.1} parent=1 // pred_check
      _
    $region43: #{ranker_forward.1} parent=1 // pred_check_branch
      %732 = sbr.rel (0) target = $region45
    $region44: #{ranker_forward.1} parent=1 // pred_region
      _
    $region45: #{ranker_forward.1} parent=1 // pred_fallthru
      _
    %733 = vsyncpa [#allocation3], 1
    %734 = vsyncpa [#allocation5], 1

</llo_original>
